<compile_context>
chip_gen: v6e
topology: v6e:2x2x1
jax: 0.10.0
libtpu: 0.0.40
codegen_flags: <defaults>
</compile_context>

<pallas_src>
import jax
import jax.numpy as jnp
from jax.experimental import pallas as pl
from jax.experimental.pallas import tpu as pltpu

SUBLANE = 8
VMEM_LIMIT_BYTES = 32 * 1024 * 1024   # explicit: fits v7x (64 MiB phys) and v5e
VMEM_BUDGET = 24 * 1024 * 1024        # sizing budget w/ headroom below the limit


def _round_up(x, m):
    return (x + m - 1) // m * m


def h_kernel(x_ref, w_ref, b_ref, o_ref):
    """One M-tile of the highway 'H' forward.

    x_ref: (TM, S) f32 activations
    w_ref: (S, S)  f32 weight, pre-transposed to (in_features, out_features)
    b_ref: (1, S)  f32 bias
    o_ref: (TM, S) f32
    """
    x = x_ref[...]
    # Lane-contiguous MXU feed: x @ Wt (Wt already (in, out)), f32 accumulate.
    y = jnp.dot(x, w_ref[...], preferred_element_type=jnp.float32) + b_ref[...]
    # sigmoid via a single EUP tanh (keeps VALU slots free in the tail).
    t = 0.5 * (jnp.tanh(0.5 * y) + 1.0)
    h = jnp.maximum(y, 0.0)
    # relu(y)*t + x*(1-t)  ==  x + t*(h - x)
    o_ref[...] = (x + t * (h - x)).astype(o_ref.dtype)


def prep_h_params(w_h, b_h):
    """One-time parameter prep (setup time, not per forward call).

    Transposes the PyTorch (out_features, in_features) weight to (in, out) so
    the kernel's matmul needs no per-step transposed view; bias becomes (1,S).
    No padding: the kernel works on the raw feature width.
    """
    s_out, _ = w_h.shape
    return jnp.transpose(w_h), b_h.reshape(1, s_out)


def _choose_tm(B, S):
    """Row-tile size.

    * tiny B  : single full-extent tile -> zero padding / extra copies
    * medium B: split into exactly 2 grid steps (both TCs busy on v7x)
    * large B : biggest tile the VMEM budget allows, capped at 1024 rows
                (512-1024 is the measured HBM-roofline sweet spot).
    """
    w_bytes = 2 * (S * S + S) * 4          # W + bias (double-buffered, worst case)
    per_row = 4 * S * 4                    # x + out, double-buffered, f32
    tm_cap = max(SUBLANE, (VMEM_BUDGET - w_bytes) // per_row)
    tm_cap = max(SUBLANE, min(1024, tm_cap // SUBLANE * SUBLANE))
    if B <= SUBLANE:
        return B                           # full extent, no row padding at all
    if B <= 2 * tm_cap:
        return _round_up((B + 1) // 2, SUBLANE)   # exactly 2 parallel steps
    return tm_cap


@jax.jit
def highway_h(x, w_t, b_2d):
    """Forward of module H. x: (B, S) f32; w_t/b_2d from prep_h_params."""
    B, S = x.shape
    tm = _choose_tm(B, S)
    Bp = _round_up(B, tm)

    # Only pad rows (never features), and only when the tile doesn't divide B.
    x_in = x if Bp == B else jnp.zeros((Bp, S), x.dtype).at[:B, :].set(x)

    cost = pl.CostEstimate(
        flops=2 * Bp * S * S + 6 * Bp * S,
        transcendentals=Bp * S,
        bytes_accessed=2 * 4 * Bp * S + 4 * (S * S + S),
    )

    out_p = pl.pallas_call(
        h_kernel,
        out_shape=jax.ShapeDtypeStruct((Bp, S), x.dtype),
        grid_spec=pltpu.PrefetchScalarGridSpec(
            num_scalar_prefetch=0,
            grid=(Bp // tm,),
            in_specs=[
                pl.BlockSpec((tm, S), lambda i: (i, 0)),  # x tile (pipelined)
                pl.BlockSpec((S, S), lambda i: (0, 0)),   # W: constant index -> fetched once, VMEM-resident
                pl.BlockSpec((1, S), lambda i: (0, 0)),   # bias: resident
            ],
            out_specs=pl.BlockSpec((tm, S), lambda i: (i, 0)),
        ),
        compiler_params=pltpu.CompilerParams(
            dimension_semantics=("parallel",),            # megacore sharding on v7x
            vmem_limit_bytes=VMEM_LIMIT_BYTES,
        ),
        cost_estimate=cost,
    )(x_in, w_t, b_2d)

    return out_p if Bp == B else out_p[:B]


if __name__ == "__main__":
    size = 32
    batch = 8

    key = jax.random.PRNGKey(0)
    kx, kw, kb, kwt, kbt = jax.random.split(key, 5)

    # nn.Linear default-style init: U(-1/sqrt(in), 1/sqrt(in))
    bound = 1.0 / (size ** 0.5)
    w_h = jax.random.uniform(kw, (size, size), jnp.float32, -bound, bound)  # H.weight (out, in)
    b_h = jax.random.uniform(kb, (size,), jnp.float32, -bound, bound)       # H.bias
    # T = nn.Linear(size, 1) is declared in __init__ but never used in forward.
    w_t_unused = jax.random.uniform(kwt, (1, size), jnp.float32, -bound, bound)
    b_t_unused = jax.random.uniform(kbt, (1,), jnp.float32, -bound, bound)

    x = jax.random.normal(kx, (batch, size), jnp.float32)

    # One-time parameter prep (outside the per-call hot path).
    w_t, b_2d = prep_h_params(w_h, b_h)

    out = jax.block_until_ready(highway_h(x, w_t, b_2d))

    # Reference in plain JAX (original unpadded shapes / layouts).
    y_ref = x @ w_h.T + b_h
    t_ref = jax.nn.sigmoid(y_ref)
    ref = jnp.maximum(y_ref, 0.0) * t_ref + x * (1.0 - t_ref)
    assert out.shape == ref.shape, "shape mismatch vs reference"
    assert jnp.allclose(out, ref, atol=1e-4, rtol=1e-4), "mismatch vs reference"

    print("KERNEL_OK")
</pallas_src>

<mosaic_0001>
module attributes {stable_mosaic.version = 11 : i64} {
  func.func @h_kernel(%arg0: i32, %arg1: memref<8x32xf32, #tpu.memory_space<vmem>>, %arg2: memref<32x32xf32, #tpu.memory_space<vmem>>, %arg3: memref<1x32xf32, #tpu.memory_space<vmem>>, %arg4: memref<8x32xf32, #tpu.memory_space<vmem>>) attributes {dimension_semantics = [#tpu.dimension_semantics<parallel>], iteration_bounds = array<i64: 1>, scalar_prefetch = 0 : i64, scratch_operands = 0 : i64, tpu.core_type = #tpu.core_type<tc>, window_params = [{transform_indices = @transform_0, window_bounds = array<i64: 8, 32>}, {pipeline_mode = #tpu.pipeline_mode<synchronous>, transform_indices = @transform_1, window_bounds = array<i64: 32, 32>}, {pipeline_mode = #tpu.pipeline_mode<synchronous>, transform_indices = @transform_2, window_bounds = array<i64: 1, 32>}, {transform_indices = @transform_3, window_bounds = array<i64: 8, 32>}]} {
    %c0 = arith.constant 0 : index
    %c0_0 = arith.constant 0 : index
    %0 = vector.load %arg1[%c0, %c0_0] : memref<8x32xf32, #tpu.memory_space<vmem>>, vector<8x32xf32>
    %c0_1 = arith.constant 0 : index
    %c0_2 = arith.constant 0 : index
    %1 = vector.load %arg2[%c0_1, %c0_2] : memref<32x32xf32, #tpu.memory_space<vmem>>, vector<32x32xf32>
    %cst = arith.constant dense<0.000000e+00> : vector<8x32xf32>
    %2 = tpu.matmul %0, %1, %cst {dimension_numbers = #tpu.dot_dimension_numbers<[1], [0], [0], [1], [0, 0, 1, 1], [], []>} : vector<8x32xf32>, vector<32x32xf32>, vector<8x32xf32> -> vector<8x32xf32>
    %c0_3 = arith.constant 0 : index
    %c0_4 = arith.constant 0 : index
    %3 = vector.load %arg3[%c0_3, %c0_4] : memref<1x32xf32, #tpu.memory_space<vmem>>, vector<1x32xf32>
    %4 = vector.broadcast %3 : vector<1x32xf32> to vector<8x32xf32>
    %5 = arith.addf %2, %4 : vector<8x32xf32>
    %cst_5 = arith.constant 5.000000e-01 : f32
    %6 = vector.broadcast %cst_5 : f32 to vector<8x32xf32>
    %7 = arith.mulf %6, %5 : vector<8x32xf32>
    %8 = math.tanh %7 : vector<8x32xf32>
    %cst_6 = arith.constant 1.000000e+00 : f32
    %9 = vector.broadcast %cst_6 : f32 to vector<8x32xf32>
    %10 = arith.addf %8, %9 : vector<8x32xf32>
    %cst_7 = arith.constant 5.000000e-01 : f32
    %11 = vector.broadcast %cst_7 : f32 to vector<8x32xf32>
    %12 = arith.mulf %11, %10 : vector<8x32xf32>
    %cst_8 = arith.constant 0.000000e+00 : f32
    %13 = vector.broadcast %cst_8 : f32 to vector<8x32xf32>
    %14 = arith.maximumf %5, %13 : vector<8x32xf32>
    %15 = arith.subf %14, %0 : vector<8x32xf32>
    %16 = arith.mulf %12, %15 : vector<8x32xf32>
    %17 = arith.addf %0, %16 : vector<8x32xf32>
    %c0_9 = arith.constant 0 : index
    %c0_10 = arith.constant 0 : index
    %18 = vector.load %arg4[%c0_9, %c0_10] : memref<8x32xf32, #tpu.memory_space<vmem>>, vector<8x32xf32>
    tpu.vector_store %arg4[%c0_9, %c0_10], %17 {strides = array<i32>} : memref<8x32xf32, #tpu.memory_space<vmem>>, vector<8x32xf32>,
    return
  }
  func.func @transform_0(%arg0: i32) -> (i32, i32) {
    %c0_i32 = arith.constant 0 : i32
    %c0_i32_0 = arith.constant 0 : i32
    return %arg0, %c0_i32 : i32, i32
  }
  func.func @transform_1(%arg0: i32) -> (i32, i32) {
    %c0_i32 = arith.constant 0 : i32
    %c0_i32_0 = arith.constant 0 : i32
    %c0_i32_1 = arith.constant 0 : i32
    return %c0_i32, %c0_i32_0 : i32, i32
  }
  func.func @transform_2(%arg0: i32) -> (i32, i32) {
    %c0_i32 = arith.constant 0 : i32
    %c0_i32_0 = arith.constant 0 : i32
    %c0_i32_1 = arith.constant 0 : i32
    return %c0_i32, %c0_i32_0 : i32, i32
  }
  func.func @transform_3(%arg0: i32) -> (i32, i32) {
    %c0_i32 = arith.constant 0 : i32
    %c0_i32_0 = arith.constant 0 : i32
    return %arg0, %c0_i32 : i32, i32
  }
}

</mosaic_0001>

<llo_original>
// kernel: highway_h.1
$region0: #{highway_h.1}
  #allocation0 [shape = 'u32[]', space=smem, size = 0x4, offset = 0x4, fixed_abs, tag = 'smem constant byte address 0x4 - core index']
  #allocation1 [shape = 'u32[144,128]{1,0:T(1,128)}', space=vmem, size = 0x12000, scoped, tag = 'internal scratch']
  %s0 = inlined_call_operand.hbm [shape: f32[8,32], index: 0, kind: input, shape index: {}]
  %s1 = inlined_call_operand.hbm [shape: f32[32,32], index: 1, kind: input, shape index: {}]
  %s2 = inlined_call_operand.vmem [shape: f32[1,32], index: 2, kind: input, shape index: {}]
  %s3 = inlined_call_operand.hbm [shape: f32[8,32], index: 3, kind: output, shape index: {}]
  %s4 = sld [smem:[#allocation0]]
  $region30: #{highway_h.1} parent=0
    _
  %s6 = ssub.s32 1, %s4
  %s7 = scalar_select 0, %s6, %s4
  $region1: #{highway_h.1} parent=0
    #allocation2 [shape = 'u8[4096]{0}', space=vmem, size = 0x1000, scoped, tag = 'input window, operand 0, single buffered']
    #allocation3 [shape = 's32[1]{0}', space=sflag, size = 0x4, scoped, tag = 'scoped memory for highway_h.1']
    #allocation4 [shape = 's32[1]{0}', space=sflag, size = 0x4, scoped, tag = 'scoped memory for highway_h.1']
    #allocation5 [shape = 'u8[16384]{0}', space=vmem, size = 0x4000, scoped, tag = 'input window, operand 1, single buffered']
    #allocation6 [shape = 's32[1]{0}', space=sflag, size = 0x4, scoped, tag = 'scoped memory for highway_h.1']
    #allocation7 [shape = 'u8[4096]{0}', space=vmem, size = 0x1000, scoped, tag = 'output window, operand 0, single buffered']
    %8 = vsyncpa [#allocation3], 0
    %9 = vsyncpa [#allocation6], 0
    %10 = vsyncpa [#allocation4], 0
    // Predicated region
    $region2: #{highway_h.1} parent=1 // pred_check
      _
    $region3: #{highway_h.1} parent=1 // pred_check_branch
      %12 = sbr.rel (0) target = $region5
    $region4: #{highway_h.1} parent=1 // pred_region
      %s14 = ssub.s32 128, 128
      %15 = vsyncadd [#allocation3], %s14
      %s17 = sshll.u32 [#allocation2], 4
      %s18 = int_to_ptr.vmem [resolvable:$true] %s17
      %20 = dma.hbm_to_vmem [thread:$0]  %s0, 128, %s18, [#allocation3]
    $region5: #{highway_h.1} parent=1 // pred_fallthru
      _
    // Predicated region
    $region6: #{highway_h.1} parent=1 // pred_check
      _
    $region7: #{highway_h.1} parent=1 // pred_check_branch
      %22 = sbr.rel (0) target = $region9
    $region8: #{highway_h.1} parent=1 // pred_region
      %s24 = ssub.s32 512, 512
      %25 = vsyncadd [#allocation6], %s24
      %s26 = sshll.u32 [#allocation5], 4
      %s27 = int_to_ptr.vmem [resolvable:$true] %s26
      %32 = dma.hbm_to_vmem [thread:$0]  %s1, 512, %s27, [#allocation6], 128, 128, 8
    $region9: #{highway_h.1} parent=1 // pred_fallthru
      _
    // Predicated region
    $region10: #{highway_h.1} parent=1 // pred_check
      _
    $region11: #{highway_h.1} parent=1 // pred_check_branch
      %34 = sbr.rel (0) target = $region13
    $region12: #{highway_h.1} parent=1 // pred_region
      _
    $region13: #{highway_h.1} parent=1 // pred_fallthru
      _
    // Predicated region
    $region14: #{highway_h.1} parent=1 // pred_check
      _
    $region15: #{highway_h.1} parent=1 // pred_check_branch
      %36 = sbr.rel (0) target = $region17
    $region16: #{highway_h.1} parent=1 // pred_region
      %37 = dma.done [#allocation3], 128
    $region17: #{highway_h.1} parent=1 // pred_fallthru
      _
    // Predicated region
    $region18: #{highway_h.1} parent=1 // pred_check
      _
    $region19: #{highway_h.1} parent=1 // pred_check_branch
      %39 = sbr.rel (0) target = $region21
    $region20: #{highway_h.1} parent=1 // pred_region
      %40 = dma.done [#allocation6], 512
    $region21: #{highway_h.1} parent=1 // pred_fallthru
      _
    %v41 = vld [vmem:[#allocation2] sm:$0xff]
    %v42 = vld [vmem:[#allocation5] sm:$0xff]
    %v43 = vld [vmem:[#allocation5 + $0x8] sm:$0xff]
    %v44 = vld [vmem:[#allocation5 + $0x10] sm:$0xff]
    %v45 = vld [vmem:[#allocation5 + $0x18] sm:$0xff]
    %v46 = vld [vmem:[%s2] sm:$0x1]
    %v48 = vlaneseq
    %v49 = vshrl.u32 %v48, 7
    %v50 = vsub.s32 0, %v49
    %v51 = vrot.slane %v46, %v50
    %vm53 = vcmask 261120
    %v55 = vsel %vm53, %v41, 0
    %57 = vmatprep.subr.mxu0 0.0
    %58 = vmatpush1.msra.mxu0 0.0
    %59 = vmatprep.subr.mxu0 0.0
    %60 = vmatpush1.msra.mxu0 0.0
    %61 = vmatprep.subr.mxu0 0.0
    %62 = vmatpush1.msra.mxu0 0.0
    %63 = vmatprep.subr.mxu0 0.0
    %64 = vmatpush1.msra.mxu0 0.0
    %65 = vmatprep.subr.mxu0 0.0
    %66 = vmatpush1.msra.mxu0 0.0
    %67 = vmatprep.subr.mxu0 0.0
    %68 = vmatpush1.msra.mxu0 0.0
    %69 = vmatprep.subr.mxu0 0.0
    %70 = vmatpush1.msra.mxu0 0.0
    %71 = vmatprep.subr.mxu0 0.0
    %72 = vmatpush1.msra.mxu0 0.0
    %73 = vmatprep.subr.mxu0 0.0
    %74 = vmatpush1.msra.mxu0 0.0
    %75 = vmatprep.subr.mxu0 0.0
    %76 = vmatpush1.msra.mxu0 0.0
    %77 = vmatprep.subr.mxu0 0.0
    %78 = vmatpush1.msra.mxu0 0.0
    %79 = vmatprep.subr.mxu0 0.0
    %80 = vmatpush1.msra.mxu0 0.0
    %81 = vmatprep.subr.mxu0 0.0
    %82 = vmatpush1.msra.mxu0 %v45
    %83 = vmatprep.subr.mxu0 0.0
    %84 = vmatpush1.msra.mxu0 %v44
    %85 = vmatprep.subr.mxu0 0.0
    %86 = vmatpush1.msra.mxu0 %v43
    %87 = vmatprep.subr.mxu0 0.0
    %88 = vmatpush1.msra.mxu0 %v42
    %89 = vmatprep.subr.mxu0 0.0
    %90 = vmatpush2.msra.mxu0 0.0
    %91 = vmatprep.subr.mxu0 0.0
    %92 = vmatpush2.msra.mxu0 0.0
    %93 = vmatprep.subr.mxu0 0.0
    %94 = vmatpush2.msra.mxu0 0.0
    %95 = vmatprep.subr.mxu0 0.0
    %96 = vmatpush2.msra.mxu0 0.0
    %97 = vmatprep.subr.mxu0 0.0
    %98 = vmatpush2.msra.mxu0 0.0
    %99 = vmatprep.subr.mxu0 0.0
    %100 = vmatpush2.msra.mxu0 0.0
    %101 = vmatprep.subr.mxu0 0.0
    %102 = vmatpush2.msra.mxu0 0.0
    %103 = vmatprep.subr.mxu0 0.0
    %104 = vmatpush2.msra.mxu0 0.0
    %105 = vmatprep.subr.mxu0 0.0
    %106 = vmatpush2.msra.mxu0 0.0
    %107 = vmatprep.subr.mxu0 0.0
    %108 = vmatpush2.msra.mxu0 0.0
    %109 = vmatprep.subr.mxu0 0.0
    %110 = vmatpush2.msra.mxu0 0.0
    %111 = vmatprep.subr.mxu0 0.0
    %112 = vmatpush2.msra.mxu0 0.0
    %113 = vmatprep.subr.mxu0 0.0
    %114 = vmatpush2.msra.mxu0 0.0
    %115 = vmatprep.subr.mxu0 0.0
    %116 = vmatpush2.msra.mxu0 0.0
    %117 = vmatprep.subr.mxu0 0.0
    %118 = vmatpush2.msra.mxu0 0.0
    %119 = vmatprep.subr.mxu0 0.0
    %120 = vmatpush2.msra.mxu0 0.0
    %121 = vmatprep.mubr.f32.mxu0 0.0
    %122 = vmatmul.mubr.f32.gmra.mxu0 %v55
    %v123 = vpop.f32.mrf.mxu0
    %v124 = vadd.f32 %v51, %v123
    %v125 = vpop.f32.mrf.mxu0
    %126 = vdwg.mxu0
    %v127 = vmul.f32 %v124, 0.5
    %v128 = vtanh.pop %v127
    %v129 = vadd.f32 %v128, 1.0
    %v130 = vmul.f32 %v129, 0.5
    %v131 = vmax.f32 %v124, 0.0
    %v132 = vsub.f32 %v131, %v41
    %v133 = vmul.f32 %v130, %v132
    %v134 = vadd.f32 %v41, %v133
    %135 = vst.msk [vmem:[#allocation7] sm:$0xff] %vm53, %v134
    // Predicated region
    $region22: #{highway_h.1} parent=1 // pred_check
      _
    $region23: #{highway_h.1} parent=1 // pred_check_branch
      %137 = sbr.rel (0) target = $region25
    $region24: #{highway_h.1} parent=1 // pred_region
      %s139 = ssub.s32 128, 128
      %140 = vsyncadd [#allocation4], %s139
      %s142 = sshll.u32 [#allocation7], 4
      %s143 = int_to_ptr.vmem [resolvable:$true] %s142
      %145 = dma.vmem_to_hbm [thread:$0]  %s143, 128, %s3, [#allocation4]
    $region25: #{highway_h.1} parent=1 // pred_fallthru
      _
    // Predicated region
    $region26: #{highway_h.1} parent=1 // pred_check
      _
    $region27: #{highway_h.1} parent=1 // pred_check_branch
      %147 = sbr.rel (0) target = $region29
    $region28: #{highway_h.1} parent=1 // pred_region
      %148 = dma.done [#allocation4], 128
    $region29: #{highway_h.1} parent=1 // pred_fallthru
      _
    %149 = vsyncpa [#allocation3], 1
    %150 = vsyncpa [#allocation6], 1
    %151 = vsyncpa [#allocation4], 1

</llo_original>
